<compile_context>
chip_gen: v7x
topology: tpu7x:2x2x1
jax: 0.10.0
libtpu: 0.0.40
codegen_flags: <defaults>
</compile_context>

<pallas_src>
import functools

import jax
import jax.numpy as jnp
from jax.experimental import pallas as pl
from jax.experimental.pallas import tpu as pltpu

_LANE = 128


def _round_up(n, m):
    return ((n + m - 1) // m) * m


def _pick_batch_tile(batch):
    for tb in (256, 128, 64, 32, 16, 8):
        if batch % tb == 0:
            return tb
    return batch  # full-array block (legal for any batch)


def _fused_mlp_kernel(x_ref, w_pre_ref, b_pre_ref, w_mid_ref, b_mid_ref,
                      w_post_ref, b_post_ref, out_ref, hid_ref, y_ref, *, n_mid):
    """One (batch-tile, middle-layer) grid step.

    Grid = (num_batch_tiles ["parallel"], n_mid ["arbitrary"]).
      l == 0       : y = x @ W_pre + b_pre                      (pre)
      every step l : hid[l] = y ; y = relu(y @ W_mid[l] + b_mid[l])
      l == n_mid-1 : out = y @ W_post + b_post                  (post)

    y lives in a per-batch-tile f32 VMEM scratch, so the pipeline prefetches
    layer l+1's weights while layer l runs on the MXU, and each layer's hidden
    state streams back to HBM as soon as it is produced.  MXU inputs are bf16,
    accumulation is f32.
    """
    l = pl.program_id(1)
    mxu_dtype = w_mid_ref.dtype

    @pl.when(l == 0)
    def _():
        y0 = jnp.dot(x_ref[...].astype(mxu_dtype), w_pre_ref[...],
                     preferred_element_type=jnp.float32)
        y_ref[...] = y0 + b_pre_ref[...]

    y = y_ref[...]
    hid_ref[0] = y.astype(hid_ref.dtype)
    z = jnp.dot(y.astype(mxu_dtype), w_mid_ref[0],
                preferred_element_type=jnp.float32)
    y_ref[...] = jnp.maximum(z + b_mid_ref[0], 0.0)

    @pl.when(l == n_mid - 1)
    def _():
        zf = jnp.dot(y_ref[...].astype(mxu_dtype), w_post_ref[...],
                     preferred_element_type=jnp.float32)
        out_ref[...] = (zf + b_post_ref[...]).astype(out_ref.dtype)


def fused_mlp(x, w_pre, b_pre, w_mid, b_mid, w_post, b_post, *, batch_tile=None):
    """x: [B, d_in] (unpadded f32).  Weights: output dims lane-padded to 128
    multiples, stored in bf16; biases f32 (1, padded_dim).
    Returns (out [B, dpo] f32, hid [n_mid, B, dph] f32)."""
    B, d_in = x.shape
    dph = w_pre.shape[1]
    dpo = w_post.shape[1]
    n_mid = w_mid.shape[0]
    assert n_mid >= 1

    tb = batch_tile if batch_tile is not None else _pick_batch_tile(B)
    assert B % tb == 0
    n_bt = B // tb

    flops = 2 * B * (d_in * dph + n_mid * dph * dph + dph * dpo)
    bytes_in = sum(int(a.size) * a.dtype.itemsize
                   for a in (x, w_pre, b_pre, w_mid, b_mid, w_post, b_post))
    bytes_out = 4 * (B * dpo + n_mid * B * dph)

    # Explicit scoped-VMEM budget: double-buffered per-step blocks (x/out/hid +
    # one middle layer's weights) + the constant pre/post weights + the y carry.
    wb = w_pre.dtype.itemsize
    vmem_est = (2 * tb * d_in * 4                                   # x blocks
                + 2 * tb * dpo * 4                                  # out blocks
                + 2 * tb * dph * 4                                  # hid blocks
                + 2 * (dph * dph * wb + dph * 4)                    # W_mid/b_mid
                + 2 * ((d_in + dpo) * dph * wb + (dph + dpo) * 4)   # pre/post
                + tb * dph * 4)                                     # y carry
    vmem_limit = int(min(128 * 1024 * 1024, max(2 * vmem_est, 32 * 1024 * 1024)))

    kernel = functools.partial(_fused_mlp_kernel, n_mid=n_mid)
    return pl.pallas_call(
        kernel,
        out_shape=(
            jax.ShapeDtypeStruct((B, dpo), jnp.float32),
            jax.ShapeDtypeStruct((n_mid, B, dph), jnp.float32),
        ),
        grid=(n_bt, n_mid),
        in_specs=[
            pl.BlockSpec((tb, d_in), lambda b, l: (b, 0)),           # x
            pl.BlockSpec((d_in, dph), lambda b, l: (0, 0)),          # W_pre
            pl.BlockSpec((1, dph), lambda b, l: (0, 0)),             # b_pre
            pl.BlockSpec((1, dph, dph), lambda b, l: (l, 0, 0)),     # W_mid[l]
            pl.BlockSpec((1, 1, dph), lambda b, l: (l, 0, 0)),       # b_mid[l]
            pl.BlockSpec((dph, dpo), lambda b, l: (0, 0)),           # W_post
            pl.BlockSpec((1, dpo), lambda b, l: (0, 0)),             # b_post
        ],
        out_specs=(
            pl.BlockSpec((tb, dpo), lambda b, l: (b, 0)),            # out
            pl.BlockSpec((1, tb, dph), lambda b, l: (l, b, 0)),      # hid[l]
        ),
        scratch_shapes=[pltpu.VMEM((tb, dph), jnp.float32)],         # y carry
        compiler_params=pltpu.CompilerParams(
            dimension_semantics=("parallel", "arbitrary"),
            vmem_limit_bytes=vmem_limit,
        ),
        cost_estimate=pl.CostEstimate(
            flops=flops,
            transcendentals=0,
            bytes_accessed=bytes_in + bytes_out,
        ),
    )(x, w_pre, b_pre, w_mid, b_mid, w_post, b_post)


class ModelZeroPallas:
    """JAX/Pallas port of Model_ZERO with Linear pre / [Linear+ReLU] middles / Linear post."""

    def __init__(self, key, d_in, d_hid, d_out, n_mid, *, batch_tile=None,
                 mxu_dtype=jnp.bfloat16):
        assert n_mid >= 1
        self.d_in, self.d_hid, self.d_out, self.n_mid = d_in, d_hid, d_out, n_mid

        def init_linear(k, din, dout):
            kw, kb = jax.random.split(k)
            scale = 1.0 / jnp.sqrt(din)
            w = jax.random.uniform(kw, (din, dout), jnp.float32, -scale, scale)
            b = jax.random.uniform(kb, (1, dout), jnp.float32, -scale, scale)
            return w, b

        keys = jax.random.split(key, n_mid + 2)
        self.pre = init_linear(keys[0], d_in, d_hid)
        self.ms = [init_linear(keys[1 + i], d_hid, d_hid) for i in range(n_mid)]
        self.post = init_linear(keys[-1], d_hid, d_out)

        # Lane-pad only the OUTPUT dims of each weight (zero padding is exact:
        # padded lanes stay 0 through matmul/bias/ReLU).  Contraction dim of
        # W_pre stays at d_in so x needs no wrapper-side pad.
        dph = _round_up(d_hid, _LANE)
        dpo = _round_up(d_out, _LANE)

        def padw(a, rows, cols):
            return jnp.pad(a, ((0, rows - a.shape[0]),
                               (0, cols - a.shape[1]))).astype(mxu_dtype)

        def padb(a, cols):  # biases stay f32 (added to the f32 accumulator)
            return jnp.pad(a, ((0, 0), (0, cols - a.shape[1])))

        w_pre, b_pre = self.pre
        self._w_pre = padw(w_pre, d_in, dph)
        self._b_pre = padb(b_pre, dph)
        self._w_mid = jnp.stack([padw(w, dph, dph) for (w, _) in self.ms])
        self._b_mid = jnp.stack([padb(b, dph) for (_, b) in self.ms])
        w_post, b_post = self.post
        self._w_post = padw(w_post, dph, dpo)
        self._b_post = padb(b_post, dpo)

        @jax.jit
        def _fwd(x, w_pre_p, b_pre_p, w_mid_p, b_mid_p, w_post_p, b_post_p):
            out_pad, hid_pad = fused_mlp(x, w_pre_p, b_pre_p, w_mid_p, b_mid_p,
                                         w_post_p, b_post_p, batch_tile=batch_tile)
            out = out_pad[:, :d_out] if dpo != d_out else out_pad
            hid = hid_pad[:, :, :d_hid] if dph != d_hid else hid_pad
            return out, hid

        self._fwd = _fwd

    def __call__(self, x, return_hidden_states=False):
        out, hid = self._fwd(x, self._w_pre, self._b_pre, self._w_mid,
                             self._b_mid, self._w_post, self._b_post)
        if return_hidden_states:
            return out, [hid[i] for i in range(self.n_mid)]
        return out


if __name__ == "__main__":
    # Small shapes: d_hid is a 128-multiple (lane-dense hid writeback, no
    # slicing); d_out=64 exercises the padded/sliced output path; batch_tile=8
    # exercises the "parallel" batch-tile axis (2 tiles x 3 layer steps).
    B, D_IN, D_HID, D_OUT, N_MID = 16, 32, 128, 64, 3

    key = jax.random.PRNGKey(0)
    k_params, k_x = jax.random.split(key)

    model = ModelZeroPallas(k_params, D_IN, D_HID, D_OUT, N_MID, batch_tile=8)
    x = jax.random.normal(k_x, (B, D_IN), jnp.float32)

    out = model(x, return_hidden_states=False)
    out_h, hiddens = model(x, return_hidden_states=True)

    jax.block_until_ready(out)
    jax.block_until_ready(out_h)
    jax.block_until_ready(hiddens)

    # Sanity: pure-JAX f32 reference (unpadded params).  Kernel uses bf16 MXU
    # inputs with f32 accumulation, so compare with loosened tolerance.
    def ref_forward(x):
        w, b = model.pre
        y = x @ w + b
        hs = []
        for (wm, bm) in model.ms:
            hs.append(y)
            y = jnp.maximum(y @ wm + bm, 0.0)
        w, b = model.post
        return y @ w + b, hs

    ref_out, ref_hs = ref_forward(x)
    TOL = dict(atol=5e-2, rtol=5e-2)
    assert out.shape == (B, D_OUT)
    assert jnp.allclose(out, ref_out, **TOL)
    assert jnp.allclose(out_h, ref_out, **TOL)
    assert len(hiddens) == N_MID
    for h, rh in zip(hiddens, ref_hs):
        assert h.shape == rh.shape
        assert jnp.allclose(h, rh, **TOL)

    print("KERNEL_OK")
</pallas_src>

<mosaic_0001>
module attributes {stable_mosaic.version = 11 : i64} {
  func.func @_fused_mlp_kernel(%arg0: i32, %arg1: i32, %arg2: memref<8x32xf32, #tpu.memory_space<vmem>>, %arg3: memref<32x128xbf16, #tpu.memory_space<vmem>>, %arg4: memref<1x128xf32, #tpu.memory_space<vmem>>, %arg5: memref<1x128x128xbf16, #tpu.memory_space<vmem>>, %arg6: memref<1x1x128xf32, #tpu.memory_space<vmem>>, %arg7: memref<128x128xbf16, #tpu.memory_space<vmem>>, %arg8: memref<1x128xf32, #tpu.memory_space<vmem>>, %arg9: memref<8x128xf32, #tpu.memory_space<vmem>>, %arg10: memref<1x8x128xf32, #tpu.memory_space<vmem>>, %arg11: memref<8x128xf32, #tpu.memory_space<vmem>>) attributes {dimension_semantics = [#tpu.dimension_semantics<parallel>, #tpu.dimension_semantics<arbitrary>], iteration_bounds = array<i64: 2, 3>, scalar_prefetch = 0 : i64, scratch_operands = 1 : i64, tpu.core_type = #tpu.core_type<tc>, window_params = [{transform_indices = @transform_0, window_bounds = array<i64: 8, 32>}, {pipeline_mode = #tpu.pipeline_mode<synchronous>, transform_indices = @transform_1, window_bounds = array<i64: 32, 128>}, {pipeline_mode = #tpu.pipeline_mode<synchronous>, transform_indices = @transform_2, window_bounds = array<i64: 1, 128>}, {transform_indices = @transform_3, window_bounds = array<i64: 1, 128, 128>}, {transform_indices = @transform_4, window_bounds = array<i64: 1, 1, 128>}, {pipeline_mode = #tpu.pipeline_mode<synchronous>, transform_indices = @transform_5, window_bounds = array<i64: 128, 128>}, {pipeline_mode = #tpu.pipeline_mode<synchronous>, transform_indices = @transform_6, window_bounds = array<i64: 1, 128>}, {transform_indices = @transform_7, window_bounds = array<i64: 8, 128>}, {transform_indices = @transform_8, window_bounds = array<i64: 1, 8, 128>}]} {
    %c0_i32 = arith.constant 0 : i32
    %0 = arith.cmpi eq, %arg1, %c0_i32 : i32
    %1 = arith.extui %0 : i1 to i32
    %c0_i32_0 = arith.constant 0 : i32
    %2 = arith.cmpi ne, %1, %c0_i32_0 : i32
    scf.if %2 {
      %c0_15 = arith.constant 0 : index
      %c0_16 = arith.constant 0 : index
      %21 = vector.load %arg2[%c0_15, %c0_16] : memref<8x32xf32, #tpu.memory_space<vmem>>, vector<8x32xf32>
      %22 = arith.truncf %21 : vector<8x32xf32> to vector<8x32xbf16>
      %c0_17 = arith.constant 0 : index
      %c0_18 = arith.constant 0 : index
      %23 = vector.load %arg3[%c0_17, %c0_18] : memref<32x128xbf16, #tpu.memory_space<vmem>>, vector<32x128xbf16>
      %cst_19 = arith.constant dense<0.000000e+00> : vector<8x128xf32>
      %24 = tpu.matmul %22, %23, %cst_19 {dimension_numbers = #tpu.dot_dimension_numbers<[1], [0], [0], [1], [0, 0, 1, 1], [], []>} : vector<8x32xbf16>, vector<32x128xbf16>, vector<8x128xf32> -> vector<8x128xf32>
      %c0_20 = arith.constant 0 : index
      %c0_21 = arith.constant 0 : index
      %25 = vector.load %arg4[%c0_20, %c0_21] : memref<1x128xf32, #tpu.memory_space<vmem>>, vector<1x128xf32>
      %26 = vector.broadcast %25 : vector<1x128xf32> to vector<8x128xf32>
      %27 = arith.addf %24, %26 : vector<8x128xf32>
      %c0_22 = arith.constant 0 : index
      %c0_23 = arith.constant 0 : index
      %28 = vector.load %arg11[%c0_22, %c0_23] : memref<8x128xf32, #tpu.memory_space<vmem>>, vector<8x128xf32>
      tpu.vector_store %arg11[%c0_22, %c0_23], %27 {strides = array<i32>} : memref<8x128xf32, #tpu.memory_space<vmem>>, vector<8x128xf32>,
    } else {
    }
    %c0 = arith.constant 0 : index
    %c0_1 = arith.constant 0 : index
    %3 = vector.load %arg11[%c0, %c0_1] : memref<8x128xf32, #tpu.memory_space<vmem>>, vector<8x128xf32>
    %c0_2 = arith.constant 0 : index
    %c0_3 = arith.constant 0 : index
    %c0_4 = arith.constant 0 : index
    %4 = vector.load %arg10[%c0_2, %c0_3, %c0_4] : memref<1x8x128xf32, #tpu.memory_space<vmem>>, vector<1x8x128xf32>
    %5 = vector.shape_cast %4 : vector<1x8x128xf32> to vector<8x128xf32>
    %6 = vector.shape_cast %3 : vector<8x128xf32> to vector<1x8x128xf32>
    tpu.vector_store %arg10[%c0_2, %c0_3, %c0_4], %6 {strides = array<i32>} : memref<1x8x128xf32, #tpu.memory_space<vmem>>, vector<1x8x128xf32>,
    %7 = arith.truncf %3 : vector<8x128xf32> to vector<8x128xbf16>
    %c0_5 = arith.constant 0 : index
    %c0_6 = arith.constant 0 : index
    %c0_7 = arith.constant 0 : index
    %8 = vector.load %arg5[%c0_5, %c0_6, %c0_7] : memref<1x128x128xbf16, #tpu.memory_space<vmem>>, vector<1x128x128xbf16>
    %9 = vector.shape_cast %8 : vector<1x128x128xbf16> to vector<128x128xbf16>
    %cst = arith.constant dense<0.000000e+00> : vector<8x128xf32>
    %10 = tpu.matmul %7, %9, %cst {dimension_numbers = #tpu.dot_dimension_numbers<[1], [0], [0], [1], [0, 0, 1, 1], [], []>} : vector<8x128xbf16>, vector<128x128xbf16>, vector<8x128xf32> -> vector<8x128xf32>
    %c0_8 = arith.constant 0 : index
    %c0_9 = arith.constant 0 : index
    %c0_10 = arith.constant 0 : index
    %11 = vector.load %arg6[%c0_8, %c0_9, %c0_10] : memref<1x1x128xf32, #tpu.memory_space<vmem>>, vector<1x1x128xf32>
    %12 = vector.shape_cast %11 : vector<1x1x128xf32> to vector<1x128xf32>
    %13 = vector.broadcast %12 : vector<1x128xf32> to vector<8x128xf32>
    %14 = arith.addf %10, %13 : vector<8x128xf32>
    %cst_11 = arith.constant 0.000000e+00 : f32
    %15 = vector.broadcast %cst_11 : f32 to vector<8x128xf32>
    %16 = arith.maximumf %14, %15 : vector<8x128xf32>
    %c0_12 = arith.constant 0 : index
    %c0_13 = arith.constant 0 : index
    %17 = vector.load %arg11[%c0_12, %c0_13] : memref<8x128xf32, #tpu.memory_space<vmem>>, vector<8x128xf32>
    tpu.vector_store %arg11[%c0_12, %c0_13], %16 {strides = array<i32>} : memref<8x128xf32, #tpu.memory_space<vmem>>, vector<8x128xf32>,
    %c2_i32 = arith.constant 2 : i32
    %18 = arith.cmpi eq, %arg1, %c2_i32 : i32
    %19 = arith.extui %18 : i1 to i32
    %c0_i32_14 = arith.constant 0 : i32
    %20 = arith.cmpi ne, %19, %c0_i32_14 : i32
    scf.if %20 {
      %c0_15 = arith.constant 0 : index
      %c0_16 = arith.constant 0 : index
      %21 = vector.load %arg11[%c0_15, %c0_16] : memref<8x128xf32, #tpu.memory_space<vmem>>, vector<8x128xf32>
      %22 = arith.truncf %21 : vector<8x128xf32> to vector<8x128xbf16>
      %c0_17 = arith.constant 0 : index
      %c0_18 = arith.constant 0 : index
      %23 = vector.load %arg7[%c0_17, %c0_18] : memref<128x128xbf16, #tpu.memory_space<vmem>>, vector<128x128xbf16>
      %cst_19 = arith.constant dense<0.000000e+00> : vector<8x128xf32>
      %24 = tpu.matmul %22, %23, %cst_19 {dimension_numbers = #tpu.dot_dimension_numbers<[1], [0], [0], [1], [0, 0, 1, 1], [], []>} : vector<8x128xbf16>, vector<128x128xbf16>, vector<8x128xf32> -> vector<8x128xf32>
      %c0_20 = arith.constant 0 : index
      %c0_21 = arith.constant 0 : index
      %25 = vector.load %arg8[%c0_20, %c0_21] : memref<1x128xf32, #tpu.memory_space<vmem>>, vector<1x128xf32>
      %26 = vector.broadcast %25 : vector<1x128xf32> to vector<8x128xf32>
      %27 = arith.addf %24, %26 : vector<8x128xf32>
      %c0_22 = arith.constant 0 : index
      %c0_23 = arith.constant 0 : index
      %28 = vector.load %arg9[%c0_22, %c0_23] : memref<8x128xf32, #tpu.memory_space<vmem>>, vector<8x128xf32>
      tpu.vector_store %arg9[%c0_22, %c0_23], %27 {strides = array<i32>} : memref<8x128xf32, #tpu.memory_space<vmem>>, vector<8x128xf32>,
    } else {
    }
    return
  }
  func.func @transform_0(%arg0: i32, %arg1: i32) -> (i32, i32) {
    %c0_i32 = arith.constant 0 : i32
    %c0_i32_0 = arith.constant 0 : i32
    return %arg0, %c0_i32 : i32, i32
  }
  func.func @transform_1(%arg0: i32, %arg1: i32) -> (i32, i32) {
    %c0_i32 = arith.constant 0 : i32
    %c0_i32_0 = arith.constant 0 : i32
    %c0_i32_1 = arith.constant 0 : i32
    return %c0_i32, %c0_i32_0 : i32, i32
  }
  func.func @transform_2(%arg0: i32, %arg1: i32) -> (i32, i32) {
    %c0_i32 = arith.constant 0 : i32
    %c0_i32_0 = arith.constant 0 : i32
    %c0_i32_1 = arith.constant 0 : i32
    return %c0_i32, %c0_i32_0 : i32, i32
  }
  func.func @transform_3(%arg0: i32, %arg1: i32) -> (i32, i32, i32) {
    %c0_i32 = arith.constant 0 : i32
    %c0_i32_0 = arith.constant 0 : i32
    %c0_i32_1 = arith.constant 0 : i32
    return %arg1, %c0_i32, %c0_i32_0 : i32, i32, i32
  }
  func.func @transform_4(%arg0: i32, %arg1: i32) -> (i32, i32, i32) {
    %c0_i32 = arith.constant 0 : i32
    %c0_i32_0 = arith.constant 0 : i32
    %c0_i32_1 = arith.constant 0 : i32
    return %arg1, %c0_i32, %c0_i32_0 : i32, i32, i32
  }
  func.func @transform_5(%arg0: i32, %arg1: i32) -> (i32, i32) {
    %c0_i32 = arith.constant 0 : i32
    %c0_i32_0 = arith.constant 0 : i32
    %c0_i32_1 = arith.constant 0 : i32
    return %c0_i32, %c0_i32_0 : i32, i32
  }
  func.func @transform_6(%arg0: i32, %arg1: i32) -> (i32, i32) {
    %c0_i32 = arith.constant 0 : i32
    %c0_i32_0 = arith.constant 0 : i32
    %c0_i32_1 = arith.constant 0 : i32
    return %c0_i32, %c0_i32_0 : i32, i32
  }
  func.func @transform_7(%arg0: i32, %arg1: i32) -> (i32, i32) {
    %c0_i32 = arith.constant 0 : i32
    %c0_i32_0 = arith.constant 0 : i32
    return %arg0, %c0_i32 : i32, i32
  }
  func.func @transform_8(%arg0: i32, %arg1: i32) -> (i32, i32, i32) {
    %c0_i32 = arith.constant 0 : i32
    %c0_i32_0 = arith.constant 0 : i32
    return %arg1, %arg0, %c0_i32 : i32, i32, i32
  }
}

</mosaic_0001>

<llo_original>
// kernel: _fwd.1
$region0: #{_fwd.1}
  #allocation0 [shape = 'u32[]', space=smem, size = 0x4, offset = 0x4, fixed_abs, tag = 'smem constant byte address 0x4 - core index']
  #allocation1 [shape = 'u32[144,128]{1,0:T(1,128)}', space=vmem, size = 0x12000, scoped, tag = 'internal scratch']
  #allocation2 [shape = 'f32[8,128]{1,0:T(8,128)}', space=vmem, size = 0x1000, scoped, tag = 'scratch operand']
  %s0 = inlined_call_operand.hbm [shape: f32[16,32], index: 0, kind: input, shape index: {}]
  %s1 = inlined_call_operand.hbm [shape: bf16[32,128], index: 1, kind: input, shape index: {}]
  %s2 = inlined_call_operand.vmem [shape: f32[1,128], index: 2, kind: input, shape index: {}]
  %s3 = inlined_call_operand.hbm [shape: bf16[3,128,128], index: 3, kind: input, shape index: {}]
  %s4 = inlined_call_operand.vmem [shape: f32[3,1,128], index: 4, kind: input, shape index: {}]
  %s5 = inlined_call_operand.hbm [shape: bf16[128,128], index: 5, kind: input, shape index: {}]
  %s6 = inlined_call_operand.vmem [shape: f32[1,128], index: 6, kind: input, shape index: {}]
  %s7 = inlined_call_operand.hbm [shape: f32[16,128], index: 7, kind: output, shape index: {0}]
  %s8 = inlined_call_operand.hbm [shape: f32[3,16,128], index: 8, kind: output, shape index: {1}]
  %9 = xla_tuple %s7, %s8
  %s10 = sld [smem:[#allocation0]]
  $region93: #{_fwd.1} parent=0
    _
  %s12 = ssub.s32 1, %s10
  %s13 = scalar_select 0, %s12, %s10
  $region1: #{_fwd.1} parent=0
    #allocation3 [shape = 'u8[8192]{0}', space=vmem, size = 0x2000, scoped, tag = 'input window, operand 0']
    #allocation4 [shape = 's32[2]{0}', space=sflag, size = 0x8, scoped, tag = 'scoped memory for _fwd.1']
    #allocation5 [shape = 's32[2]{0}', space=sflag, size = 0x8, scoped, tag = 'scoped memory for _fwd.1']
    #allocation6 [shape = 'u8[8192]{0}', space=vmem, size = 0x2000, scoped, tag = 'input window, operand 1, single buffered']
    #allocation7 [shape = 's32[1]{0}', space=sflag, size = 0x4, scoped, tag = 'scoped memory for _fwd.1']
    #allocation8 [shape = 'u8[65536]{0}', space=vmem, size = 0x10000, scoped, tag = 'input window, operand 3']
    #allocation9 [shape = 'u8[32768]{0}', space=vmem, size = 0x8000, scoped, tag = 'input window, operand 5, single buffered']
    #allocation10 [shape = 'u8[8192]{0}', space=vmem, size = 0x2000, scoped, tag = 'output window, operand 0']
    #allocation11 [shape = 'u8[8192]{0}', space=vmem, size = 0x2000, scoped, tag = 'output window, operand 1']
    #allocation12 [shape = 's32[2]{0}', space=sflag, size = 0x8, scoped, tag = 'scoped memory for _fwd.1']
    %14 = vsyncpa [#allocation4], 0
    %s15 = scalar_lea.sflag [#allocation4], 1
    %16 = vsyncpa %s15, 0
    %17 = vsyncpa [#allocation7], 0
    %18 = vsyncpa [#allocation5], 0
    %s19 = scalar_lea.sflag [#allocation5], 1
    %20 = vsyncpa %s19, 0
    %21 = vsyncpa [#allocation12], 0
    %s22 = scalar_lea.sflag [#allocation12], 1
    %23 = vsyncpa %s22, 0
    loop: start=0, step=1, limit=8
    $region2: #{_fwd.1} parent=1 // loop_pre_header
      _
    $region3: #{_fwd.1} parent=1 // loop_header
      %s25 = sphi 0, %s29
      %p26 = scmp.ge.s32.totalorder %s25, 8
      %s32 = sphi 0, %s44
      %s33 = sphi 0, %s40
      %s34 = sphi 0, %s32
      %s35 = sphi 0, %s33
      %s36 = sphi 0, %s34
      %s37 = sphi 0, %s35
      %s47 = sphi 0, %s49
      %s50 = sphi 0, %s47
      %s51 = sphi 0, %s50
      %s67 = sphi 0, %s51
      %s71 = sphi 0, %s71
      %s73 = sphi 0, %s71
      %s74 = sphi 0, %s73
      %s88 = sphi 0, %s74
      %s92 = sphi 0, %s92
      %s94 = sphi 0, %s92
      %s95 = sphi 0, %s94
      %s109 = sphi 0, %s95
      %s115 = sphi 0, %s117
      %s118 = sphi 0, %s115
      %s119 = sphi 0, %s118
      %s135 = sphi 0, %s119
      %s141 = sphi 0, %s143
      %s144 = sphi 0, %s141
      %s145 = sphi 0, %s144
      %s161 = sphi 0, %s145
      %s165 = sphi 0, %s165
      %s167 = sphi 0, %s165
      %s168 = sphi 0, %s167
      %s182 = sphi 0, %s168
      %s186 = sphi 0, %s186
      %s188 = sphi 0, %s186
      %s189 = sphi 0, %s188
      %s203 = sphi 0, %s189
      %s209 = sphi 0, %s211
      %s212 = sphi 0, %s209
      %s213 = sphi 0, %s212
      %s229 = sphi 0, %s213
      %s237 = sphi 0, %s239
      %s240 = sphi 0, %s237
      %s241 = sphi 0, %s240
      %s257 = sphi 0, %s241
    $region4: #{_fwd.1} parent=1 // loop_header_branch
      %28 = sbr.rel (%p26) target = $region8
    $region5: #{_fwd.1} parent=1 // loop_body
      %s30 = ssub.s32 %s25, 1
      %s31 = ssub.s32 %s25, 2
      %s38 = sadd.s32 1, %s33
      %p39 = scmp.ge.s32.totalorder %s38, 3
      %s40 = scalar_select %p39, 0, %s38
      %s41 = sadd.s32 1, %s32
      %s42 = scalar_select %p39, %s41, %s32
      %p43 = scmp.ge.s32.totalorder %s42, 2
      %s44 = scalar_select %p43, 0, %s42
      %s45 = ssub.s32 %s32, %s44
      %p46 = scmp.eq.s32.totalorder %s45, 0
      %s48 = sadd.s32 %s47, 1
      %s49 = scalar_select %p46, %s47, %s48
      %p52 = pneg %p46
      %p53 = scmp.eq.s32.totalorder %s25, 5
      %p54 = por %p52, %p53
      %p55 = scmp.ne.s32.totalorder %s47, %s50
      %p56 = scmp.eq.s32.totalorder %s25, 0
      %p57 = por %p55, %p56
      %p58 = scmp.ne.s32.totalorder %s47, %s50
      %p59 = scmp.eq.s32.totalorder %s30, 5
      %p60 = por %p58, %p59
      %p61 = scmp.ne.s32.totalorder %s50, %s51
      %p62 = scmp.eq.s32.totalorder %s30, 0
      %p63 = por %p61, %p62
      %p64 = scmp.ne.s32.totalorder %s50, %s51
      %p65 = scmp.eq.s32.totalorder %s31, 5
      %p66 = por %p64, %p65
      %p68 = scmp.ne.s32.totalorder %s51, %s67
      %p69 = scmp.eq.s32.totalorder %s31, 0
      %p70 = por %p68, %p69
      %s72 = sadd.s32 %s71, 1
      %p75 = scmp.eq.s32.totalorder %s25, 5
      %p76 = scmp.ne.s32.totalorder %s71, %s73
      %p77 = scmp.eq.s32.totalorder %s25, 0
      %p78 = por %p76, %p77
      %p79 = scmp.ne.s32.totalorder %s71, %s73
      %p80 = scmp.eq.s32.totalorder %s30, 5
      %p81 = por %p79, %p80
      %p82 = scmp.ne.s32.totalorder %s73, %s74
      %p83 = scmp.eq.s32.totalorder %s30, 0
      %p84 = por %p82, %p83
      %p85 = scmp.ne.s32.totalorder %s73, %s74
      %p86 = scmp.eq.s32.totalorder %s31, 5
      %p87 = por %p85, %p86
      %p89 = scmp.ne.s32.totalorder %s74, %s88
      %p90 = scmp.eq.s32.totalorder %s31, 0
      %p91 = por %p89, %p90
      %s93 = sadd.s32 %s92, 1
      %p96 = scmp.eq.s32.totalorder %s25, 5
      %p97 = scmp.ne.s32.totalorder %s92, %s94
      %p98 = scmp.eq.s32.totalorder %s25, 0
      %p99 = por %p97, %p98
      %p100 = scmp.ne.s32.totalorder %s92, %s94
      %p101 = scmp.eq.s32.totalorder %s30, 5
      %p102 = por %p100, %p101
      %p103 = scmp.ne.s32.totalorder %s94, %s95
      %p104 = scmp.eq.s32.totalorder %s30, 0
      %p105 = por %p103, %p104
      %p106 = scmp.ne.s32.totalorder %s94, %s95
      %p107 = scmp.eq.s32.totalorder %s31, 5
      %p108 = por %p106, %p107
      %p110 = scmp.ne.s32.totalorder %s95, %s109
      %p111 = scmp.eq.s32.totalorder %s31, 0
      %p112 = por %p110, %p111
      %s113 = ssub.s32 %s33, %s40
      %p114 = scmp.eq.s32.totalorder %s113, 0
      %s116 = sadd.s32 %s115, 1
      %s117 = scalar_select %p114, %s115, %s116
      %p120 = pneg %p114
      %p121 = scmp.eq.s32.totalorder %s25, 5
      %p122 = por %p120, %p121
      %p123 = scmp.ne.s32.totalorder %s115, %s118
      %p124 = scmp.eq.s32.totalorder %s25, 0
      %p125 = por %p123, %p124
      %p126 = scmp.ne.s32.totalorder %s115, %s118
      %p127 = scmp.eq.s32.totalorder %s30, 5
      %p128 = por %p126, %p127
      %p129 = scmp.ne.s32.totalorder %s118, %s119
      %p130 = scmp.eq.s32.totalorder %s30, 0
      %p131 = por %p129, %p130
      %p132 = scmp.ne.s32.totalorder %s118, %s119
      %p133 = scmp.eq.s32.totalorder %s31, 5
      %p134 = por %p132, %p133
      %p136 = scmp.ne.s32.totalorder %s119, %s135
      %p137 = scmp.eq.s32.totalorder %s31, 0
      %p138 = por %p136, %p137
      %s139 = ssub.s32 %s33, %s40
      %p140 = scmp.eq.s32.totalorder %s139, 0
      %s142 = sadd.s32 %s141, 1
      %s143 = scalar_select %p140, %s141, %s142
      %p146 = pneg %p140
      %p147 = scmp.eq.s32.totalorder %s25, 5
      %p148 = por %p146, %p147
      %p149 = scmp.ne.s32.totalorder %s141, %s144
      %p150 = scmp.eq.s32.totalorder %s25, 0
      %p151 = por %p149, %p150
      %p152 = scmp.ne.s32.totalorder %s141, %s144
      %p153 = scmp.eq.s32.totalorder %s30, 5
      %p154 = por %p152, %p153
      %p155 = scmp.ne.s32.totalorder %s144, %s145
      %p156 = scmp.eq.s32.totalorder %s30, 0
      %p157 = por %p155, %p156
      %p158 = scmp.ne.s32.totalorder %s144, %s145
      %p159 = scmp.eq.s32.totalorder %s31, 5
      %p160 = por %p158, %p159
      %p162 = scmp.ne.s32.totalorder %s145, %s161
      %p163 = scmp.eq.s32.totalorder %s31, 0
      %p164 = por %p162, %p163
      %s166 = sadd.s32 %s165, 1
      %p169 = scmp.eq.s32.totalorder %s25, 5
      %p170 = scmp.ne.s32.totalorder %s165, %s167
      %p171 = scmp.eq.s32.totalorder %s25, 0
      %p172 = por %p170, %p171
      %p173 = scmp.ne.s32.totalorder %s165, %s167
      %p174 = scmp.eq.s32.totalorder %s30, 5
      %p175 = por %p173, %p174
      %p176 = scmp.ne.s32.totalorder %s167, %s168
      %p177 = scmp.eq.s32.totalorder %s30, 0
      %p178 = por %p176, %p177
      %p179 = scmp.ne.s32.totalorder %s167, %s168
      %p180 = scmp.eq.s32.totalorder %s31, 5
      %p181 = por %p179, %p180
      %p183 = scmp.ne.s32.totalorder %s168, %s182
      %p184 = scmp.eq.s32.totalorder %s31, 0
      %p185 = por %p183, %p184
      %s187 = sadd.s32 %s186, 1
      %p190 = scmp.eq.s32.totalorder %s25, 5
      %p191 = scmp.ne.s32.totalorder %s186, %s188
      %p192 = scmp.eq.s32.totalorder %s25, 0
      %p193 = por %p191, %p192
      %p194 = scmp.ne.s32.totalorder %s186, %s188
      %p195 = scmp.eq.s32.totalorder %s30, 5
      %p196 = por %p194, %p195
      %p197 = scmp.ne.s32.totalorder %s188, %s189
      %p198 = scmp.eq.s32.totalorder %s30, 0
      %p199 = por %p197, %p198
      %p200 = scmp.ne.s32.totalorder %s188, %s189
      %p201 = scmp.eq.s32.totalorder %s31, 5
      %p202 = por %p200, %p201
      %p204 = scmp.ne.s32.totalorder %s189, %s203
      %p205 = scmp.eq.s32.totalorder %s31, 0
      %p206 = por %p204, %p205
      %s207 = ssub.s32 %s32, %s44
      %p208 = scmp.eq.s32.totalorder %s207, 0
      %s210 = sadd.s32 %s209, 1
      %s211 = scalar_select %p208, %s209, %s210
      %p214 = pneg %p208
      %p215 = scmp.eq.s32.totalorder %s25, 5
      %p216 = por %p214, %p215
      %p217 = scmp.ne.s32.totalorder %s209, %s212
      %p218 = scmp.eq.s32.totalorder %s25, 0
      %p219 = por %p217, %p218
      %p220 = scmp.ne.s32.totalorder %s209, %s212
      %p221 = scmp.eq.s32.totalorder %s30, 5
      %p222 = por %p220, %p221
      %p223 = scmp.ne.s32.totalorder %s212, %s213
      %p224 = scmp.eq.s32.totalorder %s30, 0
      %p225 = por %p223, %p224
      %p226 = scmp.ne.s32.totalorder %s212, %s213
      %p227 = scmp.eq.s32.totalorder %s31, 5
      %p228 = por %p226, %p227
      %p230 = scmp.ne.s32.totalorder %s213, %s229
      %p231 = scmp.eq.s32.totalorder %s31, 0
      %p232 = por %p230, %p231
      %s233 = ssub.s32 %s33, %s40
      %s234 = ssub.s32 %s32, %s44
      %s235 = sor.u32 %s233, %s234
      %p236 = scmp.eq.s32.totalorder %s235, 0
      %s238 = sadd.s32 %s237, 1
      %s239 = scalar_select %p236, %s237, %s238
      %p242 = pneg %p236
      %p243 = scmp.eq.s32.totalorder %s25, 5
      %p244 = por %p242, %p243
      %p245 = scmp.ne.s32.totalorder %s237, %s240
      %p246 = scmp.eq.s32.totalorder %s25, 0
      %p247 = por %p245, %p246
      %p248 = scmp.ne.s32.totalorder %s237, %s240
      %p249 = scmp.eq.s32.totalorder %s30, 5
      %p250 = por %p248, %p249
      %p251 = scmp.ne.s32.totalorder %s240, %s241
      %p252 = scmp.eq.s32.totalorder %s30, 0
      %p253 = por %p251, %p252
      %p254 = scmp.ne.s32.totalorder %s240, %s241
      %p255 = scmp.eq.s32.totalorder %s31, 5
      %p256 = por %p254, %p255
      %p258 = scmp.ne.s32.totalorder %s241, %s257
      %p259 = scmp.eq.s32.totalorder %s31, 0
      %p260 = por %p258, %p259
      %p261 = scmp.le.s32.totalorder 1, %s25
      %p262 = scmp.lt.s32.totalorder %s25, 7
      %p263 = pnand %p261, %p262
      %p264 = pneg %p263
      // Predicated region
      $region9: #{_fwd.1} parent=5 // pred_check
        _
      $region10: #{_fwd.1} parent=5 // pred_check_branch
        %266 = sbr.rel (%p263) target = $region12
      $region11: #{_fwd.1} parent=5 // pred_region
        %s267 = ssub.s32 %s25, 1
        // Predicated region
        $region13: #{_fwd.1} parent=11 // pred_check
          %p268 = pneg %p84
        $region14: #{_fwd.1} parent=11 // pred_check_branch
          %270 = sbr.rel (%p268) target = $region16
        $region15: #{_fwd.1} parent=11 // pred_region
          %s272 = ssub.s32 256, 256
          %273 = vsyncadd [#allocation7], %s272
          %s274 = sshll.u32 [#allocation6], 4
          %s275 = int_to_ptr.vmem [resolvable:$true] %s274
          %280 = dma.hbm_to_vmem [thread:$0]  %s1, 256, %s275, [#allocation7], 64, 64, 4
        $region16: #{_fwd.1} parent=11 // pred_fallthru
          _
        // Predicated region
        $region17: #{_fwd.1} parent=11 // pred_check
          %p281 = pneg %p105
        $region18: #{_fwd.1} parent=11 // pred_check_branch
          %283 = sbr.rel (%p281) target = $region20
        $region19: #{_fwd.1} parent=11 // pred_region
          _
        $region20: #{_fwd.1} parent=11 // pred_fallthru
          _
        // Predicated region
        $region21: #{_fwd.1} parent=11 // pred_check
          %p284 = pneg %p178
        $region22: #{_fwd.1} parent=11 // pred_check_branch
          %286 = sbr.rel (%p284) target = $region24
        $region23: #{_fwd.1} parent=11 // pred_region
          %s288 = ssub.s32 1024, 1024
          %289 = vsyncadd [#allocation7], %s288
          %s290 = sshll.u32 [#allocation9], 4
          %s291 = int_to_ptr.vmem [resolvable:$true] %s290
          %296 = dma.hbm_to_vmem [thread:$0]  %s5, 1024, %s291, [#allocation7], 64, 64, 4
        $region24: #{_fwd.1} parent=11 // pred_fallthru
          _
        // Predicated region
        $region25: #{_fwd.1} parent=11 // pred_check
          %p297 = pneg %p199
        $region26: #{_fwd.1} parent=11 // pred_check_branch
          %299 = sbr.rel (%p297) target = $region28
        $region27: #{_fwd.1} parent=11 // pred_region
          _
        $region28: #{_fwd.1} parent=11 // pred_fallthru
          _
      $region12: #{_fwd.1} parent=5 // pred_fallthru
        _
      %p300 = scmp.lt.s32.totalorder %s25, 6
      // Predicated region
      $region29: #{_fwd.1} parent=5 // pred_check
        %p301 = pneg %p300
      $region30: #{_fwd.1} parent=5 // pred_check_branch
        %303 = sbr.rel (%p301) target = $region32
      $region31: #{_fwd.1} parent=5 // pred_region
        // Predicated region
        $region33: #{_fwd.1} parent=31 // pred_check
          %p304 = pneg %p57
        $region34: #{_fwd.1} parent=31 // pred_check_branch
          %306 = sbr.rel (%p304) target = $region36
        $region35: #{_fwd.1} parent=31 // pred_region
          %s307 = sand.u32 %s25, 1
          %s308 = scalar_lea.sflag [#allocation4], %s307
          %s309 = sand.u32 %s47, 1
          %s310 = smul.addr %s309, 8
          %s311 = scalar_lea.vmem [#allocation3], %s310
          %s313 = ssub.s32 128, 128
          %314 = vsyncadd %s308, %s313
          %s315 = smul.addr %s32, 128
          %s316 = scalar_lea.hbm %s0, %s315
          %s318 = sshll.u32 %s311, 4
          %s319 = int_to_ptr.vmem [resolvable:$true] %s318
          %321 = dma.hbm_to_vmem [thread:$0]  %s316, 128, %s319, %s308
        $region36: #{_fwd.1} parent=31 // pred_fallthru
          _
        // Predicated region
        $region37: #{_fwd.1} parent=31 // pred_check
          %p322 = pneg %p125
        $region38: #{_fwd.1} parent=31 // pred_check_branch
          %324 = sbr.rel (%p322) target = $region40
        $region39: #{_fwd.1} parent=31 // pred_region
          %s325 = sand.u32 %s25, 1
          %s326 = scalar_lea.sflag [#allocation4], %s325
          %s327 = sand.u32 %s115, 1
          %s328 = smul.addr %s327, 64
          %s329 = scalar_lea.vmem [#allocation8], %s328
          %s331 = ssub.s32 1024, 1024
          %332 = vsyncadd %s326, %s331
          %s333 = smul.addr %s33, 16
          %s334 = smul.addr %s333, 64
          %s335 = scalar_lea.hbm %s3, %s334
          %s336 = sshll.u32 %s329, 4
          %s337 = int_to_ptr.vmem [resolvable:$true] %s336
          %342 = dma.hbm_to_vmem [thread:$0]  %s335, 1024, %s337, %s326, 64, 64, 4
        $region40: #{_fwd.1} parent=31 // pred_fallthru
          _
        // Predicated region
        $region41: #{_fwd.1} parent=31 // pred_check
          %p343 = pneg %p151
        $region42: #{_fwd.1} parent=31 // pred_check_branch
          %345 = sbr.rel (%p343) target = $region44
        $region43: #{_fwd.1} parent=31 // pred_region
          %p346 = scmp.lt.s32.totalorder %s33, 2
          %s347 = scalar_select %p346, %s33, 2
          %s348 = scalar_lea.vmem %s4, %s347
        $region44: #{_fwd.1} parent=31 // pred_fallthru
          _
      $region32: #{_fwd.1} parent=5 // pred_fallthru
        _
      %p349 = scmp.le.s32.totalorder 1, %s25
      %p350 = scmp.lt.s32.totalorder %s25, 7
      %p351 = pnand %p349, %p350
      %p352 = pneg %p351
      // Predicated region
      $region45: #{_fwd.1} parent=5 // pred_check
        _
      $region46: #{_fwd.1} parent=5 // pred_check_branch
        %354 = sbr.rel (%p351) target = $region48
      $region47: #{_fwd.1} parent=5 // pred_region
        %s355 = ssub.s32 %s25, 1
        %s356 = sand.u32 %s30, 1
        %s357 = scalar_lea.sflag [#allocation4], %s356
        %s358 = sand.u32 %s50, 1
        %s359 = smul.addr %s358, 8
        %s360 = scalar_lea.vmem [#allocation3], %s359
        // Predicated region
        $region49: #{_fwd.1} parent=47 // pred_check
          %p361 = pneg %p63
        $region50: #{_fwd.1} parent=47 // pred_check_branch
          %363 = sbr.rel (%p361) target = $region52
        $region51: #{_fwd.1} parent=47 // pred_region
          %364 = dma.done %s357, 128
        $region52: #{_fwd.1} parent=47 // pred_fallthru
          _
        // Predicated region
        $region53: #{_fwd.1} parent=47 // pred_check
          %p365 = pneg %p84
        $region54: #{_fwd.1} parent=47 // pred_check_branch
          %367 = sbr.rel (%p365) target = $region56
        $region55: #{_fwd.1} parent=47 // pred_region
          %368 = dma.done [#allocation7], 256
        $region56: #{_fwd.1} parent=47 // pred_fallthru
          _
        %s369 = sand.u32 %s30, 1
        %s370 = scalar_lea.sflag [#allocation4], %s369
        %s371 = sand.u32 %s118, 1
        %s372 = smul.addr %s371, 64
        %s373 = scalar_lea.vmem [#allocation8], %s372
        // Predicated region
        $region57: #{_fwd.1} parent=47 // pred_check
          %p374 = pneg %p131
        $region58: #{_fwd.1} parent=47 // pred_check_branch
          %376 = sbr.rel (%p374) target = $region60
        $region59: #{_fwd.1} parent=47 // pred_region
          %377 = dma.done %s370, 1024
        $region60: #{_fwd.1} parent=47 // pred_fallthru
          _
        // Predicated region
        $region61: #{_fwd.1} parent=47 // pred_check
          %p378 = pneg %p178
        $region62: #{_fwd.1} parent=47 // pred_check_branch
          %380 = sbr.rel (%p378) target = $region64
        $region63: #{_fwd.1} parent=47 // pred_region
          %381 = dma.done [#allocation7], 1024
        $region64: #{_fwd.1} parent=47 // pred_fallthru
          _
        %s382 = sand.u32 %s30, 1
        %s383 = scalar_lea.sflag [#allocation4], %s382
        %s384 = sand.u32 %s50, 1
        %s385 = smul.addr %s384, 8
        %s386 = scalar_lea.vmem [#allocation3], %s385
        %p387 = pneg %p63
        %p388 = pneg %p60
        %p389 = pneg %p84
        %p390 = pneg %p81
        %p391 = pneg %p105
        %p392 = pneg %p102
        %s393 = sand.u32 %s30, 1
        %s394 = scalar_lea.sflag [#allocation4], %s393
        %s395 = sand.u32 %s118, 1
        %s396 = smul.addr %s395, 64
        %s397 = scalar_lea.vmem [#allocation8], %s396
        %p398 = pneg %p131
        %p399 = pneg %p128
        %p400 = scmp.lt.s32.totalorder %s35, 2
        %s401 = scalar_select %p400, %s35, 2
        %s402 = scalar_lea.vmem %s4, %s401
        %p403 = pneg %p157
        %p404 = pneg %p154
        %p405 = pneg %p178
        %p406 = pneg %p175
        %p407 = pneg %p199
        %p408 = pneg %p196
        %p409 = pneg %p225
        %p410 = pneg %p222
        %s411 = sand.u32 %s212, 1
        %s412 = scalar_lea.sflag [#allocation5], %s411
        %s413 = sand.u32 %s212, 1
        %s414 = smul.addr %s413, 8
        %s415 = scalar_lea.vmem [#allocation10], %s414
        %p416 = pneg %p253
        %p417 = pneg %p250
        %s418 = sand.u32 %s240, 1
        %s419 = scalar_lea.sflag [#allocation12], %s418
        %s420 = sand.u32 %s240, 1
        %s421 = smul.addr %s420, 8
        %s422 = scalar_lea.vmem [#allocation11], %s421
        %p423 = scmp.lt.s32.totalorder %s35, 2
        %s424 = scalar_select %p423, %s35, 2
        %s425 = scalar_lea.vmem %s4, %s424
        %p427 = scmp.eq.s32.totalorder %s35, 0
        // Predicated region
        $region65: #{_fwd.1} parent=47 // pred_check
          %p428 = pneg %p427
        $region66: #{_fwd.1} parent=47 // pred_check_branch
          %430 = sbr.rel (%p428) target = $region68
        $region67: #{_fwd.1} parent=47 // pred_region
          %v431 = vld [vmem:[%s360] sm:$0xff]
          %v432 = vpack.c.bf16 %v431, %v431
          %v433 = vld [vmem:[#allocation6] sm:$0xf]
          %v434 = vld [vmem:[#allocation6 + $0x4] sm:$0xf]
          %v435 = vld [vmem:[#allocation6 + $0x8] sm:$0xf]
          %v436 = vld [vmem:[#allocation6 + $0xc] sm:$0xf]
          %v437 = vld [vmem:[%s2] sm:$0x1]
          %v439 = vlaneseq
          %v440 = vshrl.u32 %v439, 7
          %v441 = vsub.s32 0, %v440
          %v442 = vrot.slane %v437, %v441
          %v448 = vunpack.c.l.b16 %v433
          %v449 = vunpack.c.l.b16 %v434
          %v450 = vunpack.c.l.b16 %v435
          %v451 = vunpack.c.l.b16 %v436
          %v452 = vpack.c.b16 %v449, %v448
          %v453 = vpack.c.b16 %v451, %v450
          %vm456 = vcmask 261120
          %v458 = vsel %vm456, %v432, 0
          %460 = vmatprep.subr.bf16.mxu0 0
          %461 = vmatpush1.bf16.msra.mxu0 %v452
          %462 = vmatprep.subr.bf16.mxu0 0
          %463 = vmatpush1.bf16.msra.mxu0 %v453
          %464 = vmatprep.subr.bf16.mxu0 0
          %465 = vmatpush1.bf16.msra.mxu0 0
          %466 = vmatprep.subr.bf16.mxu0 0
          %467 = vmatpush1.bf16.msra.mxu0 0
          %468 = vmatprep.subr.bf16.mxu0 0
          %469 = vmatpush1.bf16.msra.mxu0 0
          %470 = vmatprep.subr.bf16.mxu0 0
          %471 = vmatpush1.bf16.msra.mxu0 0
          %472 = vmatprep.subr.bf16.mxu0 0
          %473 = vmatpush1.bf16.msra.mxu0 0
          %474 = vmatprep.subr.bf16.mxu0 0
          %475 = vmatpush1.bf16.msra.mxu0 0
          %476 = vmatprep.subr.bf16.mxu0 0
          %477 = vmatpush1.bf16.msra.mxu0 0
          %478 = vmatprep.subr.bf16.mxu0 0
          %479 = vmatpush1.bf16.msra.mxu0 0
          %480 = vmatprep.subr.bf16.mxu0 0
          %481 = vmatpush1.bf16.msra.mxu0 0
          %482 = vmatprep.subr.bf16.mxu0 0
          %483 = vmatpush1.bf16.msra.mxu0 0
          %484 = vmatprep.subr.bf16.mxu0 0
          %485 = vmatpush1.bf16.msra.mxu0 0
          %486 = vmatprep.subr.bf16.mxu0 0
          %487 = vmatpush1.bf16.msra.mxu0 0
          %488 = vmatprep.subr.bf16.mxu0 0
          %489 = vmatpush1.bf16.msra.mxu0 0
          %490 = vmatprep.subr.bf16.mxu0 0
          %491 = vmatpush1.bf16.msra.mxu0 0
          %492 = vmatprep.mubr.bf16.mxu0 0
          %493 = vmatmul.mubr.bf16.gmra.mrb[0].mxu0 %v458
          %v494 = vpop.f32.mrb[0].mxu0
          %v495 = vadd.f32 %v442, %v494
          %v496 = vpop.f32.mrb[0].mxu0
          %v497 = vpop.f32.mrb[0].mxu0
          %v498 = vpop.f32.mrb[0].mxu0
          %499 = vdwg.mxu0
          %500 = vst [vmem:[#allocation2] sm:$0xff] %v495
        $region68: #{_fwd.1} parent=47 // pred_fallthru
          _
        %v501 = vld [vmem:[#allocation2] sm:$0xff]
        %502 = vst [vmem:[%s422] sm:$0xff] %v501
        %v503 = vpack.c.bf16 %v501, %v501
        %v504 = vld [vmem:[%s373] sm:$0xf]
        %v505 = vld [vmem:[%s373 + $0x4] sm:$0xf]
        %v506 = vld [vmem:[%s373 + $0x8] sm:$0xf]
        %v507 = vld [vmem:[%s373 + $0xc] sm:$0xf]
        %v508 = vld [vmem:[%s373 + $0x10] sm:$0xf]
        %v509 = vld [vmem:[%s373 + $0x14] sm:$0xf]
        %v510 = vld [vmem:[%s373 + $0x18] sm:$0xf]
        %v511 = vld [vmem:[%s373 + $0x1c] sm:$0xf]
        %v512 = vld [vmem:[%s373 + $0x20] sm:$0xf]
        %v513 = vld [vmem:[%s373 + $0x24] sm:$0xf]
        %v514 = vld [vmem:[%s373 + $0x28] sm:$0xf]
        %v515 = vld [vmem:[%s373 + $0x2c] sm:$0xf]
        %v516 = vld [vmem:[%s373 + $0x30] sm:$0xf]
        %v517 = vld [vmem:[%s373 + $0x34] sm:$0xf]
        %v518 = vld [vmem:[%s373 + $0x38] sm:$0xf]
        %v519 = vld [vmem:[%s373 + $0x3c] sm:$0xf]
        %v520 = vld [vmem:[%s425] sm:$0x1]
        %v522 = vlaneseq
        %v523 = vshrl.u32 %v522, 7
        %v524 = vsub.s32 0, %v523
        %v525 = vrot.slane %v520, %v524
        %v543 = vunpack.c.l.b16 %v504
        %v544 = vunpack.c.l.b16 %v505
        %v545 = vunpack.c.l.b16 %v506
        %v546 = vunpack.c.l.b16 %v507
        %v547 = vunpack.c.l.b16 %v508
        %v548 = vunpack.c.l.b16 %v509
        %v549 = vunpack.c.l.b16 %v510
        %v550 = vunpack.c.l.b16 %v511
        %v551 = vunpack.c.l.b16 %v512
        %v552 = vunpack.c.l.b16 %v513
        %v553 = vunpack.c.l.b16 %v514
        %v554 = vunpack.c.l.b16 %v515
        %v555 = vunpack.c.l.b16 %v516
        %v556 = vunpack.c.l.b16 %v517
        %v557 = vunpack.c.l.b16 %v518
        %v558 = vunpack.c.l.b16 %v519
        %v559 = vpack.c.b16 %v544, %v543
        %v560 = vpack.c.b16 %v546, %v545
        %v561 = vpack.c.b16 %v548, %v547
        %v562 = vpack.c.b16 %v550, %v549
        %v563 = vpack.c.b16 %v552, %v551
        %v564 = vpack.c.b16 %v554, %v553
        %v565 = vpack.c.b16 %v556, %v555
        %v566 = vpack.c.b16 %v558, %v557
        %575 = vmatprep.subr.bf16.mxu0 0
        %576 = vmatpush1.bf16.msra.mxu0 %v559
        %577 = vmatprep.subr.bf16.mxu0 0
        %578 = vmatpush1.bf16.msra.mxu0 %v560
        %579 = vmatprep.subr.bf16.mxu0 0
        %580 = vmatpush1.bf16.msra.mxu0 %v561
        %581 = vmatprep.subr.bf16.mxu0 0
        %582 = vmatpush1.bf16.msra.mxu0 %v562
        %583 = vmatprep.subr.bf16.mxu0 0
        %584 = vmatpush1.bf16.msra.mxu0 %v563
        %585 = vmatprep.subr.bf16.mxu0 0
        %586 = vmatpush1.bf16.msra.mxu0 %v564
        %587 = vmatprep.subr.bf16.mxu0 0
        %588 = vmatpush1.bf16.msra.mxu0 %v565
        %589 = vmatprep.subr.bf16.mxu0 0
        %590 = vmatpush1.bf16.msra.mxu0 %v566
        %591 = vmatprep.subr.bf16.mxu0 0
        %592 = vmatpush1.bf16.msra.mxu0 0
        %593 = vmatprep.subr.bf16.mxu0 0
        %594 = vmatpush1.bf16.msra.mxu0 0
        %595 = vmatprep.subr.bf16.mxu0 0
        %596 = vmatpush1.bf16.msra.mxu0 0
        %597 = vmatprep.subr.bf16.mxu0 0
        %598 = vmatpush1.bf16.msra.mxu0 0
        %599 = vmatprep.subr.bf16.mxu0 0
        %600 = vmatpush1.bf16.msra.mxu0 0
        %601 = vmatprep.subr.bf16.mxu0 0
        %602 = vmatpush1.bf16.msra.mxu0 0
        %603 = vmatprep.subr.bf16.mxu0 0
        %604 = vmatpush1.bf16.msra.mxu0 0
        %605 = vmatprep.subr.bf16.mxu0 0
        %606 = vmatpush1.bf16.msra.mxu0 0
        %607 = vmatprep.mubr.bf16.mxu0 0
        %608 = vmatmul.mubr.bf16.gmra.mrb[0].mxu0 %v503
        %v609 = vpop.f32.mrb[0].mxu0
        %v610 = vadd.f32 %v525, %v609
        %v611 = vpop.f32.mrb[0].mxu0
        %v612 = vpop.f32.mrb[0].mxu0
        %v613 = vpop.f32.mrb[0].mxu0
        %614 = vdwg.mxu0
        %v615 = vmax.f32 %v610, 0.0
        %616 = vst [vmem:[#allocation2] sm:$0xff] %v615
        %p617 = scmp.eq.s32.totalorder %s35, 2
        // Predicated region
        $region69: #{_fwd.1} parent=47 // pred_check
          %p618 = pneg %p617
        $region70: #{_fwd.1} parent=47 // pred_check_branch
          %620 = sbr.rel (%p618) target = $region72
        $region71: #{_fwd.1} parent=47 // pred_region
          %v621 = vld [vmem:[#allocation2] sm:$0xff]
          %v622 = vpack.c.bf16 %v621, %v621
          %v623 = vld [vmem:[#allocation9] sm:$0xf]
          %v624 = vld [vmem:[#allocation9 + $0x4] sm:$0xf]
          %v625 = vld [vmem:[#allocation9 + $0x8] sm:$0xf]
          %v626 = vld [vmem:[#allocation9 + $0xc] sm:$0xf]
          %v627 = vld [vmem:[#allocation9 + $0x10] sm:$0xf]
          %v628 = vld [vmem:[#allocation9 + $0x14] sm:$0xf]
          %v629 = vld [vmem:[#allocation9 + $0x18] sm:$0xf]
          %v630 = vld [vmem:[#allocation9 + $0x1c] sm:$0xf]
          %v631 = vld [vmem:[#allocation9 + $0x20] sm:$0xf]
          %v632 = vld [vmem:[#allocation9 + $0x24] sm:$0xf]
          %v633 = vld [vmem:[#allocation9 + $0x28] sm:$0xf]
          %v634 = vld [vmem:[#allocation9 + $0x2c] sm:$0xf]
          %v635 = vld [vmem:[#allocation9 + $0x30] sm:$0xf]
          %v636 = vld [vmem:[#allocation9 + $0x34] sm:$0xf]
          %v637 = vld [vmem:[#allocation9 + $0x38] sm:$0xf]
          %v638 = vld [vmem:[#allocation9 + $0x3c] sm:$0xf]
          %v639 = vld [vmem:[%s6] sm:$0x1]
          %v641 = vlaneseq
          %v642 = vshrl.u32 %v641, 7
          %v643 = vsub.s32 0, %v642
          %v644 = vrot.slane %v639, %v643
          %v662 = vunpack.c.l.b16 %v623
          %v663 = vunpack.c.l.b16 %v624
          %v664 = vunpack.c.l.b16 %v625
          %v665 = vunpack.c.l.b16 %v626
          %v666 = vunpack.c.l.b16 %v627
          %v667 = vunpack.c.l.b16 %v628
          %v668 = vunpack.c.l.b16 %v629
          %v669 = vunpack.c.l.b16 %v630
          %v670 = vunpack.c.l.b16 %v631
          %v671 = vunpack.c.l.b16 %v632
          %v672 = vunpack.c.l.b16 %v633
          %v673 = vunpack.c.l.b16 %v634
          %v674 = vunpack.c.l.b16 %v635
          %v675 = vunpack.c.l.b16 %v636
          %v676 = vunpack.c.l.b16 %v637
          %v677 = vunpack.c.l.b16 %v638
          %v678 = vpack.c.b16 %v663, %v662
          %v679 = vpack.c.b16 %v665, %v664
          %v680 = vpack.c.b16 %v667, %v666
          %v681 = vpack.c.b16 %v669, %v668
          %v682 = vpack.c.b16 %v671, %v670
          %v683 = vpack.c.b16 %v673, %v672
          %v684 = vpack.c.b16 %v675, %v674
          %v685 = vpack.c.b16 %v677, %v676
          %694 = vmatprep.subr.bf16.mxu0 0
          %695 = vmatpush1.bf16.msra.mxu0 %v678
          %696 = vmatprep.subr.bf16.mxu0 0
          %697 = vmatpush1.bf16.msra.mxu0 %v679
          %698 = vmatprep.subr.bf16.mxu0 0
          %699 = vmatpush1.bf16.msra.mxu0 %v680
          %700 = vmatprep.subr.bf16.mxu0 0
          %701 = vmatpush1.bf16.msra.mxu0 %v681
          %702 = vmatprep.subr.bf16.mxu0 0
          %703 = vmatpush1.bf16.msra.mxu0 %v682
          %704 = vmatprep.subr.bf16.mxu0 0
          %705 = vmatpush1.bf16.msra.mxu0 %v683
          %706 = vmatprep.subr.bf16.mxu0 0
          %707 = vmatpush1.bf16.msra.mxu0 %v684
          %708 = vmatprep.subr.bf16.mxu0 0
          %709 = vmatpush1.bf16.msra.mxu0 %v685
          %710 = vmatprep.subr.bf16.mxu0 0
          %711 = vmatpush1.bf16.msra.mxu0 0
          %712 = vmatprep.subr.bf16.mxu0 0
          %713 = vmatpush1.bf16.msra.mxu0 0
          %714 = vmatprep.subr.bf16.mxu0 0
          %715 = vmatpush1.bf16.msra.mxu0 0
          %716 = vmatprep.subr.bf16.mxu0 0
          %717 = vmatpush1.bf16.msra.mxu0 0
          %718 = vmatprep.subr.bf16.mxu0 0
          %719 = vmatpush1.bf16.msra.mxu0 0
          %720 = vmatprep.subr.bf16.mxu0 0
          %721 = vmatpush1.bf16.msra.mxu0 0
          %722 = vmatprep.subr.bf16.mxu0 0
          %723 = vmatpush1.bf16.msra.mxu0 0
          %724 = vmatprep.subr.bf16.mxu0 0
          %725 = vmatpush1.bf16.msra.mxu0 0
          %726 = vmatprep.mubr.bf16.mxu0 0
          %727 = vmatmul.mubr.bf16.gmra.mrb[0].mxu0 %v622
          %v728 = vpop.f32.mrb[0].mxu0
          %v729 = vadd.f32 %v644, %v728
          %v730 = vpop.f32.mrb[0].mxu0
          %v731 = vpop.f32.mrb[0].mxu0
          %v732 = vpop.f32.mrb[0].mxu0
          %733 = vdwg.mxu0
          %734 = vst [vmem:[%s415] sm:$0xff] %v729
        $region72: #{_fwd.1} parent=47 // pred_fallthru
          _
        %s735 = sand.u32 %s212, 1
        %s736 = scalar_lea.sflag [#allocation5], %s735
        %s737 = sand.u32 %s212, 1
        %s738 = smul.addr %s737, 8
        %s739 = scalar_lea.vmem [#allocation10], %s738
        %s740 = sand.u32 %s240, 1
        %s741 = scalar_lea.sflag [#allocation12], %s740
        %s742 = sand.u32 %s240, 1
        %s743 = smul.addr %s742, 8
        %s744 = scalar_lea.vmem [#allocation11], %s743
        // Predicated region
        $region73: #{_fwd.1} parent=47 // pred_check
          %p745 = pneg %p222
        $region74: #{_fwd.1} parent=47 // pred_check_branch
          %747 = sbr.rel (%p745) target = $region76
        $region75: #{_fwd.1} parent=47 // pred_region
          %s749 = ssub.s32 128, 128
          %750 = vsyncadd %s736, %s749
          %s751 = smul.addr %s34, 128
          %s752 = scalar_lea.hbm %s7, %s751
          %s754 = sshll.u32 %s739, 4
          %s755 = int_to_ptr.vmem [resolvable:$true] %s754
          %757 = dma.vmem_to_hbm [thread:$0]  %s755, 128, %s752, %s736
        $region76: #{_fwd.1} parent=47 // pred_fallthru
          _
        // Predicated region
        $region77: #{_fwd.1} parent=47 // pred_check
          %p758 = pneg %p250
        $region78: #{_fwd.1} parent=47 // pred_check_branch
          %760 = sbr.rel (%p758) target = $region80
        $region79: #{_fwd.1} parent=47 // pred_region
          %s762 = ssub.s32 128, 128
          %763 = vsyncadd %s741, %s762
          %s764 = smul.addr %s35, 2
          %s765 = sadd.s32 %s34, %s764
          %s766 = smul.addr %s765, 128
          %s767 = scalar_lea.hbm %s8, %s766
          %s769 = sshll.u32 %s744, 4
          %s770 = int_to_ptr.vmem [resolvable:$true] %s769
          %772 = dma.vmem_to_hbm [thread:$0]  %s770, 128, %s767, %s741
        $region80: #{_fwd.1} parent=47 // pred_fallthru
          _
      $region48: #{_fwd.1} parent=5 // pred_fallthru
        _
      %p773 = scmp.le.s32.totalorder 2, %s25
      // Predicated region
      $region81: #{_fwd.1} parent=5 // pred_check
        %p774 = pneg %p773
      $region82: #{_fwd.1} parent=5 // pred_check_branch
        %776 = sbr.rel (%p774) target = $region84
      $region83: #{_fwd.1} parent=5 // pred_region
        %s777 = ssub.s32 %s25, 2
        // Predicated region
        $region85: #{_fwd.1} parent=83 // pred_check
          %p778 = pneg %p228
        $region86: #{_fwd.1} parent=83 // pred_check_branch
          %780 = sbr.rel (%p778) target = $region88
        $region87: #{_fwd.1} parent=83 // pred_region
          %s781 = sand.u32 %s213, 1
          %s782 = scalar_lea.sflag [#allocation5], %s781
          %s783 = sand.u32 %s213, 1
          %s784 = smul.addr %s783, 8
          %s785 = scalar_lea.vmem [#allocation10], %s784
          %786 = dma.done %s782, 128
        $region88: #{_fwd.1} parent=83 // pred_fallthru
          _
        // Predicated region
        $region89: #{_fwd.1} parent=83 // pred_check
          %p787 = pneg %p256
        $region90: #{_fwd.1} parent=83 // pred_check_branch
          %789 = sbr.rel (%p787) target = $region92
        $region91: #{_fwd.1} parent=83 // pred_region
          %s790 = sand.u32 %s241, 1
          %s791 = scalar_lea.sflag [#allocation12], %s790
          %s792 = sand.u32 %s241, 1
          %s793 = smul.addr %s792, 8
          %s794 = scalar_lea.vmem [#allocation11], %s793
          %795 = dma.done %s791, 128
        $region92: #{_fwd.1} parent=83 // pred_fallthru
          _
      $region84: #{_fwd.1} parent=5 // pred_fallthru
        _
    $region6: #{_fwd.1} parent=1 // loop_footer
      %s29 = sadd.s32 1, %s25
    $region7: #{_fwd.1} parent=1 // loop_footer_branch
      %24 = sbr.rel target = $region3
    $region8: #{_fwd.1} parent=1 // loop_exit
      _
    %796 = vsyncpa [#allocation4], 1
    %s797 = scalar_lea.sflag [#allocation4], 1
    %798 = vsyncpa %s797, 1
    %799 = vsyncpa [#allocation7], 1
    %800 = vsyncpa [#allocation5], 1
    %s801 = scalar_lea.sflag [#allocation5], 1
    %802 = vsyncpa %s801, 1
    %803 = vsyncpa [#allocation12], 1
    %s804 = scalar_lea.sflag [#allocation12], 1
    %805 = vsyncpa %s804, 1

</llo_original>
